<compile_context>
chip_gen: v7x
topology: tpu7x:2x2x1
jax: 0.10.0
libtpu: 0.0.40
codegen_flags: <defaults>
</compile_context>

<pallas_src>
import jax
import jax.numpy as jnp
from jax.experimental import pallas as pl
from jax.experimental.pallas import tpu as pltpu
from math import sqrt

HIDDEN = 5
INPUT_FEATURES = 4
OUTPUT_FEATURES = 1
_LANES = 128

# Parameter slab layout (shape (8, 128), f32), hidden along sublanes:
#   slab[:HIDDEN, i]  (i < INPUT_FEATURES) : w1[i, :]   (fc1 column for input feature i)
#   slab[:HIDDEN, _COL_B1]                 : b1
#   slab[:HIDDEN, _COL_W2]                 : w2[:, 0]
#   slab[0,       _COL_B2]                 : b2
_COL_B1 = INPUT_FEATURES
_COL_W2 = INPUT_FEATURES + 1
_COL_B2 = INPUT_FEATURES + 2


def net_kernel(x_ref, p_ref, o_ref):
    # x block: (INPUT_FEATURES, tb) with batch on lanes.  Accepts bf16 input
    # (halves HBM traffic on bandwidth-starved v5e/v6e) and computes in f32.
    x = x_ref[...].astype(jnp.float32)
    p = p_ref[...]                                     # (8, 128) parameter slab

    b1 = p[:HIDDEN, _COL_B1:_COL_B1 + 1]               # (HIDDEN, 1)
    w2 = p[:HIDDEN, _COL_W2:_COL_W2 + 1]               # (HIDDEN, 1)
    b2 = p[0:1, _COL_B2:_COL_B2 + 1]                   # (1, 1)

    # ---- fc1: h[j, b] = sum_i w1[i, j] * x[i, b] + b1[j] ---------------------
    # 4 unrolled full-vreg multiply-adds; the only broadcasts are lane-splats of
    # the tiny weight columns, which are free filler under the input DMA.
    h = b1 + p[:HIDDEN, 0:1] * x[0:1, :]               # (HIDDEN, tb)
    for i in range(1, INPUT_FEATURES):
        h = h + p[:HIDDEN, i:i + 1] * x[i:i + 1, :]

    # ---- sigmoid: exact divide (plenty of VALU slack; keeps ~1e-6 parity) ----
    s = 1.0 / (1.0 + jnp.exp(-h))                      # (HIDDEN, tb)

    # ---- fc2 (N=1): 5-sublane reduce instead of a padded MXU matmul ----------
    out = jnp.sum(s * w2, axis=0, keepdims=True) + b2  # (1, tb), lane-dense store
    o_ref[...] = out.astype(o_ref.dtype)


def pack_params(w1, b1, w2, b2):
    """Pack all parameters once into a single (8, 128) f32 slab (one tiny DMA,
    resident in VMEM across all grid steps)."""
    slab = jnp.zeros((8, _LANES), jnp.float32)
    slab = slab.at[:HIDDEN, :INPUT_FEATURES].set(jnp.asarray(w1, jnp.float32).T)
    slab = slab.at[:HIDDEN, _COL_B1].set(jnp.asarray(b1, jnp.float32).reshape(-1))
    slab = slab.at[:HIDDEN, _COL_W2].set(jnp.asarray(w2, jnp.float32).reshape(-1))
    slab = slab.at[0, _COL_B2].set(jnp.asarray(b2, jnp.float32).reshape(()))
    return slab


def net_forward_t(x_t, param_slab, *, batch_tile=32768):
    """Core entry point: x_t is (INPUT_FEATURES, B); returns (OUTPUT_FEATURES, B).

    batch_tile is the lane-tile width (multiple of 128); sweep 32k-128k on
    v5e/v6e.  At 32768 lanes the double-buffered input + output tiles are only a
    few MiB, comfortably inside every generation's scoped-VMEM limit (incl. v7x).
    """
    B = x_t.shape[1]
    if B <= _LANES:
        tb = B                       # tiny batch: one full-extent block
    else:
        # Lane-dense tile rounded to 128, and >= 2 grid steps whenever possible
        # so dimension_semantics=("parallel",) can shard across v7x's two TCs.
        tb = min(batch_tile, max(_LANES, (pl.cdiv(B, 2) // _LANES) * _LANES))
    grid = (pl.cdiv(B, tb),)         # non-dividing tail handled by masked writeback
    return pl.pallas_call(
        net_kernel,
        out_shape=jax.ShapeDtypeStruct((OUTPUT_FEATURES, B), jnp.float32),
        grid=grid,
        in_specs=[
            pl.BlockSpec((INPUT_FEATURES, tb), lambda i: (0, i)),
            # Same block every grid step -> parameters stay resident in VMEM.
            pl.BlockSpec((8, _LANES), lambda i: (0, 0)),
        ],
        out_specs=pl.BlockSpec((OUTPUT_FEATURES, tb), lambda i: (0, i)),
        compiler_params=pltpu.CompilerParams(
            # Independent batch tiles -> megacore sharding on v7x.
            dimension_semantics=("parallel",),
            vmem_limit_bytes=32 * 1024 * 1024,
        ),
    )(x_t, param_slab)


def net_forward(x, param_slab, *, batch_tile=32768):
    """y = sigmoid(x @ W1 + b1) @ W2 + b2 for x of shape (B, INPUT_FEATURES).

    The kernel wants batch on lanes, so x is transposed here (ideally the
    producer emits (INPUT_FEATURES, B) directly and calls net_forward_t); the
    (1, B) -> (B, 1) output reshape is the same bytes, i.e. free.
    """
    out_t = net_forward_t(x.T, param_slab, batch_tile=batch_tile)
    return out_t.reshape(x.shape[0], OUTPUT_FEATURES)


def init_mylinear(key, in_features, out_features):
    # Matches MyLinear.__init__: weight ~ U(-sqrt(k), sqrt(k)), bias ~ U(-k, k),
    # k = 1/in_features.  PyTorch stores weight as (out, in); we keep the
    # transposed (in, out) so the reference is simply x @ W + b.
    k = 1.0 / in_features
    kw, kb = jax.random.split(key)
    weight = jax.random.uniform(
        kw, (in_features, out_features), jnp.float32, minval=-sqrt(k), maxval=sqrt(k))
    bias = jax.random.uniform(
        kb, (1, out_features), jnp.float32, minval=-k, maxval=k)
    return weight, bias


if __name__ == "__main__":
    key = jax.random.PRNGKey(0)
    kx, kx2, k1, k2 = jax.random.split(key, 4)

    w1, b1 = init_mylinear(k1, INPUT_FEATURES, HIDDEN)
    w2, b2 = init_mylinear(k2, HIDDEN, OUTPUT_FEATURES)
    slab = pack_params(w1, b1, w2, b2)   # packed once at init, not per call

    def ref_fn(x):
        return jax.nn.sigmoid(x @ w1 + b1) @ w2 + b2

    # Small batch: single full-extent block.
    batch = 8
    x = jax.random.normal(kx, (batch, INPUT_FEATURES), jnp.float32)
    out = jax.block_until_ready(net_forward(x, slab))
    assert out.shape == (batch, OUTPUT_FEATURES)
    assert jnp.allclose(out, ref_fn(x), atol=1e-5, rtol=1e-5), \
        float(jnp.max(jnp.abs(out - ref_fn(x))))

    # Lane-dense multi-tile path with a non-dividing tail (masked writeback).
    batch2 = 300
    x2 = jax.random.normal(kx2, (batch2, INPUT_FEATURES), jnp.float32)
    out2 = jax.block_until_ready(net_forward(x2, slab))
    assert out2.shape == (batch2, OUTPUT_FEATURES)
    assert jnp.allclose(out2, ref_fn(x2), atol=1e-5, rtol=1e-5), \
        float(jnp.max(jnp.abs(out2 - ref_fn(x2))))

    print("KERNEL_OK")
</pallas_src>

<mosaic_0001>
module attributes {stable_mosaic.version = 11 : i64} {
  func.func @net_kernel(%arg0: i32, %arg1: memref<4x8xf32, #tpu.memory_space<vmem>>, %arg2: memref<8x128xf32, #tpu.memory_space<vmem>>, %arg3: memref<1x8xf32, #tpu.memory_space<vmem>>) attributes {dimension_semantics = [#tpu.dimension_semantics<parallel>], iteration_bounds = array<i64: 1>, scalar_prefetch = 0 : i64, scratch_operands = 0 : i64, tpu.core_type = #tpu.core_type<tc>, window_params = [{transform_indices = @transform_0, window_bounds = array<i64: 4, 8>}, {pipeline_mode = #tpu.pipeline_mode<synchronous>, transform_indices = @transform_1, window_bounds = array<i64: 8, 128>}, {transform_indices = @transform_2, window_bounds = array<i64: 1, 8>}]} {
    %c0 = arith.constant 0 : index
    %c0_0 = arith.constant 0 : index
    %0 = vector.load %arg1[%c0, %c0_0] : memref<4x8xf32, #tpu.memory_space<vmem>>, vector<4x8xf32>
    %c0_1 = arith.constant 0 : index
    %c0_2 = arith.constant 0 : index
    %1 = vector.load %arg2[%c0_1, %c0_2] : memref<8x128xf32, #tpu.memory_space<vmem>>, vector<8x128xf32>
    %2 = vector.extract_strided_slice %1 {offsets = [0, 4], sizes = [5, 1], strides = [1, 1]} : vector<8x128xf32> to vector<5x1xf32>
    %3 = vector.extract_strided_slice %1 {offsets = [0, 5], sizes = [5, 1], strides = [1, 1]} : vector<8x128xf32> to vector<5x1xf32>
    %4 = vector.extract_strided_slice %1 {offsets = [0, 6], sizes = [1, 1], strides = [1, 1]} : vector<8x128xf32> to vector<1x1xf32>
    %5 = vector.extract_strided_slice %1 {offsets = [0, 0], sizes = [5, 1], strides = [1, 1]} : vector<8x128xf32> to vector<5x1xf32>
    %6 = vector.extract_strided_slice %0 {offsets = [0, 0], sizes = [1, 8], strides = [1, 1]} : vector<4x8xf32> to vector<1x8xf32>
    %7 = vector.broadcast %5 : vector<5x1xf32> to vector<5x8xf32>
    %8 = vector.broadcast %6 : vector<1x8xf32> to vector<5x8xf32>
    %9 = arith.mulf %7, %8 : vector<5x8xf32>
    %10 = vector.broadcast %2 : vector<5x1xf32> to vector<5x8xf32>
    %11 = arith.addf %10, %9 : vector<5x8xf32>
    %12 = vector.extract_strided_slice %1 {offsets = [0, 1], sizes = [5, 1], strides = [1, 1]} : vector<8x128xf32> to vector<5x1xf32>
    %13 = vector.extract_strided_slice %0 {offsets = [1, 0], sizes = [1, 8], strides = [1, 1]} : vector<4x8xf32> to vector<1x8xf32>
    %14 = vector.broadcast %12 : vector<5x1xf32> to vector<5x8xf32>
    %15 = vector.broadcast %13 : vector<1x8xf32> to vector<5x8xf32>
    %16 = arith.mulf %14, %15 : vector<5x8xf32>
    %17 = arith.addf %11, %16 : vector<5x8xf32>
    %18 = vector.extract_strided_slice %1 {offsets = [0, 2], sizes = [5, 1], strides = [1, 1]} : vector<8x128xf32> to vector<5x1xf32>
    %19 = vector.extract_strided_slice %0 {offsets = [2, 0], sizes = [1, 8], strides = [1, 1]} : vector<4x8xf32> to vector<1x8xf32>
    %20 = vector.broadcast %18 : vector<5x1xf32> to vector<5x8xf32>
    %21 = vector.broadcast %19 : vector<1x8xf32> to vector<5x8xf32>
    %22 = arith.mulf %20, %21 : vector<5x8xf32>
    %23 = arith.addf %17, %22 : vector<5x8xf32>
    %24 = vector.extract_strided_slice %1 {offsets = [0, 3], sizes = [5, 1], strides = [1, 1]} : vector<8x128xf32> to vector<5x1xf32>
    %25 = vector.extract_strided_slice %0 {offsets = [3, 0], sizes = [1, 8], strides = [1, 1]} : vector<4x8xf32> to vector<1x8xf32>
    %26 = vector.broadcast %24 : vector<5x1xf32> to vector<5x8xf32>
    %27 = vector.broadcast %25 : vector<1x8xf32> to vector<5x8xf32>
    %28 = arith.mulf %26, %27 : vector<5x8xf32>
    %29 = arith.addf %23, %28 : vector<5x8xf32>
    %cst = arith.constant 0.000000e+00 : f32
    %30 = vector.broadcast %cst : f32 to vector<5x8xf32>
    %31 = arith.subf %30, %29 : vector<5x8xf32>
    %32 = math.exp %31 : vector<5x8xf32>
    %cst_3 = arith.constant 1.000000e+00 : f32
    %33 = vector.broadcast %cst_3 : f32 to vector<5x8xf32>
    %34 = arith.addf %33, %32 : vector<5x8xf32>
    %cst_4 = arith.constant 1.000000e+00 : f32
    %35 = vector.broadcast %cst_4 : f32 to vector<5x8xf32>
    %36 = arith.divf %35, %34 : vector<5x8xf32>
    %37 = vector.broadcast %3 : vector<5x1xf32> to vector<5x8xf32>
    %38 = arith.mulf %36, %37 : vector<5x8xf32>
    %cst_5 = arith.constant dense<0.000000e+00> : vector<8xf32>
    %39 = vector.multi_reduction <add>, %38, %cst_5 [0] : vector<5x8xf32> to vector<8xf32>
    %40 = vector.shape_cast %39 : vector<8xf32> to vector<1x8xf32>
    %41 = vector.broadcast %4 : vector<1x1xf32> to vector<1x8xf32>
    %42 = arith.addf %40, %41 : vector<1x8xf32>
    %c0_6 = arith.constant 0 : index
    %c0_7 = arith.constant 0 : index
    %43 = vector.load %arg3[%c0_6, %c0_7] : memref<1x8xf32, #tpu.memory_space<vmem>>, vector<1x8xf32>
    tpu.vector_store %arg3[%c0_6, %c0_7], %42 {strides = array<i32>} : memref<1x8xf32, #tpu.memory_space<vmem>>, vector<1x8xf32>,
    return
  }
  func.func @transform_0(%arg0: i32) -> (i32, i32) {
    %c0_i32 = arith.constant 0 : i32
    %c0_i32_0 = arith.constant 0 : i32
    return %c0_i32, %arg0 : i32, i32
  }
  func.func @transform_1(%arg0: i32) -> (i32, i32) {
    %c0_i32 = arith.constant 0 : i32
    %c0_i32_0 = arith.constant 0 : i32
    %c0_i32_1 = arith.constant 0 : i32
    return %c0_i32, %c0_i32_0 : i32, i32
  }
  func.func @transform_2(%arg0: i32) -> (i32, i32) {
    %c0_i32 = arith.constant 0 : i32
    %c0_i32_0 = arith.constant 0 : i32
    return %c0_i32, %arg0 : i32, i32
  }
}

</mosaic_0001>

<llo_original>
// kernel: tpu_custom_call.1
$region0: #{tpu_custom_call.1}
  #allocation0 [shape = 'u32[]', space=smem, size = 0x4, offset = 0x4, fixed_abs, tag = 'smem constant byte address 0x4 - core index']
  #allocation1 [shape = 'u32[144,128]{1,0:T(1,128)}', space=vmem, size = 0x12000, scoped, tag = 'internal scratch']
  %s0 = inlined_call_operand.hbm [shape: f32[4,8], index: 0, kind: input, shape index: {}]
  %s1 = inlined_call_operand.hbm [shape: f32[8,128], index: 1, kind: input, shape index: {}]
  %s2 = inlined_call_operand.hbm [shape: f32[1,8], index: 2, kind: output, shape index: {}]
  %s3 = sld [smem:[#allocation0]]
  $region26: #{tpu_custom_call.1} parent=0
    _
  %s5 = ssub.s32 1, %s3
  %s6 = scalar_select 0, %s5, %s3
  $region1: #{tpu_custom_call.1} parent=0
    #allocation2 [shape = 'u8[2048]{0}', space=vmem, size = 0x800, scoped, tag = 'input window, operand 0, single buffered']
    #allocation3 [shape = 's32[1]{0}', space=sflag, size = 0x4, scoped, tag = 'scoped memory for tpu_custom_call.1']
    #allocation4 [shape = 's32[1]{0}', space=sflag, size = 0x4, scoped, tag = 'scoped memory for tpu_custom_call.1']
    #allocation5 [shape = 'u8[4096]{0}', space=vmem, size = 0x1000, scoped, tag = 'input window, operand 1, single buffered']
    #allocation6 [shape = 's32[1]{0}', space=sflag, size = 0x4, scoped, tag = 'scoped memory for tpu_custom_call.1']
    #allocation7 [shape = 'u8[512]{0}', space=vmem, size = 0x400, scoped, tag = 'output window, operand 0, single buffered']
    %7 = vsyncpa [#allocation3], 0
    %8 = vsyncpa [#allocation6], 0
    %9 = vsyncpa [#allocation4], 0
    // Predicated region
    $region2: #{tpu_custom_call.1} parent=1 // pred_check
      _
    $region3: #{tpu_custom_call.1} parent=1 // pred_check_branch
      %11 = sbr.rel (0) target = $region5
    $region4: #{tpu_custom_call.1} parent=1 // pred_region
      %s13 = ssub.s32 64, 64
      %14 = vsyncadd [#allocation3], %s13
      %s16 = sshll.u32 [#allocation2], 4
      %s17 = int_to_ptr.vmem [resolvable:$true] %s16
      %19 = dma.hbm_to_vmem [thread:$0]  %s0, 64, %s17, [#allocation3]
    $region5: #{tpu_custom_call.1} parent=1 // pred_fallthru
      _
    // Predicated region
    $region6: #{tpu_custom_call.1} parent=1 // pred_check
      _
    $region7: #{tpu_custom_call.1} parent=1 // pred_check_branch
      %21 = sbr.rel (0) target = $region9
    $region8: #{tpu_custom_call.1} parent=1 // pred_region
      %s23 = ssub.s32 128, 128
      %24 = vsyncadd [#allocation6], %s23
      %s26 = sshll.u32 [#allocation5], 4
      %s27 = int_to_ptr.vmem [resolvable:$true] %s26
      %29 = dma.hbm_to_vmem [thread:$0]  %s1, 128, %s27, [#allocation6]
    $region9: #{tpu_custom_call.1} parent=1 // pred_fallthru
      _
    // Predicated region
    $region10: #{tpu_custom_call.1} parent=1 // pred_check
      _
    $region11: #{tpu_custom_call.1} parent=1 // pred_check_branch
      %31 = sbr.rel (0) target = $region13
    $region12: #{tpu_custom_call.1} parent=1 // pred_region
      %32 = dma.done [#allocation3], 64
    $region13: #{tpu_custom_call.1} parent=1 // pred_fallthru
      _
    // Predicated region
    $region14: #{tpu_custom_call.1} parent=1 // pred_check
      _
    $region15: #{tpu_custom_call.1} parent=1 // pred_check_branch
      %34 = sbr.rel (0) target = $region17
    $region16: #{tpu_custom_call.1} parent=1 // pred_region
      %35 = dma.done [#allocation6], 128
    $region17: #{tpu_custom_call.1} parent=1 // pred_fallthru
      _
    %v36 = vld [vmem:[#allocation2] sm:$0xf]
    %v37 = vld [vmem:[#allocation5] sm:$0xff]
    %39 = vset.pattern.permute.xlu0 0
    %40 = vperm.xlu0 %39, %v37
    %v41 = vpop.permute.xlu0 %40
    %v43 = vlaneseq
    %v44 = vshrl.u32 %v43, 7
    %v45 = vsub.s32 0, %v44
    %v46 = vrot.slane %v36, %v45
    %v47 = vmul.f32 %v41, %v46
    %48 = vset.pattern.permute.xlu0 4
    %49 = vperm.xlu0 %48, %v37
    %v50 = vpop.permute.xlu0 %49
    %v52 = vadd.f32 %v50, %v47
    %53 = vset.pattern.permute.xlu0 1
    %54 = vperm.xlu0 %53, %v37
    %v55 = vpop.permute.xlu0 %54
    %v57 = vlaneseq
    %v58 = vshrl.u32 %v57, 7
    %v59 = vsub.s32 1, %v58
    %v60 = vrot.slane %v36, %v59
    %v61 = vmul.f32 %v55, %v60
    %v62 = vadd.f32 %v52, %v61
    %63 = vset.pattern.permute.xlu0 2
    %64 = vperm.xlu0 %63, %v37
    %v65 = vpop.permute.xlu0 %64
    %v67 = vlaneseq
    %v68 = vshrl.u32 %v67, 7
    %v69 = vsub.s32 2, %v68
    %v70 = vrot.slane %v36, %v69
    %v71 = vmul.f32 %v65, %v70
    %v72 = vadd.f32 %v62, %v71
    %73 = vset.pattern.permute.xlu0 3
    %74 = vperm.xlu0 %73, %v37
    %v75 = vpop.permute.xlu0 %74
    %v77 = vlaneseq
    %v78 = vshrl.u32 %v77, 7
    %v79 = vsub.s32 3, %v78
    %v80 = vrot.slane %v36, %v79
    %v81 = vmul.f32 %v75, %v80
    %v82 = vadd.f32 %v72, %v81
    %v83 = vsub.f32 0.0, %v82
    %v84 = vmul.f32 %v83, 1.442695
    %v85 = vpow.pop %v84
    %v86 = vadd.f32 %v85, 1.0
    %v87 = vrcp.pop %v86
    %v88 = vmul.f32 1.0, %v87
    %89 = vset.pattern.permute.xlu0 5
    %90 = vperm.xlu0 %89, %v37
    %v91 = vpop.permute.xlu0 %90
    %v93 = vmul.f32 %v88, %v91
    %vm94 = vcmask 61440
    %v95 = vsel %vm94, %v93, 0.0
    %v96 = vrot.slane %v95, 4
    %v97 = vadd.f32 %v95, %v96
    %v98 = vrot.slane %v97, 2
    %v99 = vadd.f32 %v97, %v98
    %v100 = vrot.slane %v99, 1
    %v101 = vadd.f32 %v99, %v100
    %102 = vset.pattern.permute.xlu0 6
    %103 = vperm.xlu0 %102, %v37
    %v104 = vpop.permute.xlu0 %103
    %v106 = vadd.f32 %v101, %v104
    %vm107 = vcmask 57344
    %108 = vst.msk [vmem:[#allocation7] sm:$0x1] %vm107, %v106
    // Predicated region
    $region18: #{tpu_custom_call.1} parent=1 // pred_check
      _
    $region19: #{tpu_custom_call.1} parent=1 // pred_check_branch
      %110 = sbr.rel (0) target = $region21
    $region20: #{tpu_custom_call.1} parent=1 // pred_region
      %s112 = ssub.s32 16, 16
      %113 = vsyncadd [#allocation4], %s112
      %s115 = sshll.u32 [#allocation7], 4
      %s116 = int_to_ptr.vmem [resolvable:$true] %s115
      %118 = dma.vmem_to_hbm [thread:$0]  %s116, 16, %s2, [#allocation4]
    $region21: #{tpu_custom_call.1} parent=1 // pred_fallthru
      _
    // Predicated region
    $region22: #{tpu_custom_call.1} parent=1 // pred_check
      _
    $region23: #{tpu_custom_call.1} parent=1 // pred_check_branch
      %120 = sbr.rel (0) target = $region25
    $region24: #{tpu_custom_call.1} parent=1 // pred_region
      %121 = dma.done [#allocation4], 16
    $region25: #{tpu_custom_call.1} parent=1 // pred_fallthru
      _
    %122 = vsyncpa [#allocation3], 1
    %123 = vsyncpa [#allocation6], 1
    %124 = vsyncpa [#allocation4], 1

</llo_original>
